<compile_context>
chip_gen: v5e
topology: v5e:2x2
jax: 0.10.0
libtpu: 0.0.40
codegen_flags: <defaults>
</compile_context>

<pallas_src>
import math

import jax
import jax.numpy as jnp
from jax import lax
from jax.experimental import pallas as pl
from jax.experimental.pallas import tpu as pltpu

_LANES = 128
_SUBLANES = 8
_MAX_BATCH_TILE = 2048   # rows per grid step; narrow in/out tiles keep VMEM small


def _round_up(n, m):
    return ((n + m - 1) // m) * m


def _cdiv(a, b):
    return (a + b - 1) // b


def _choose_batch_tiling(n):
    """Pick (tile_rows, grid_steps, padded_rows) for the batch axis.

    Batch is padded only to a sublane multiple (tail < grid_steps*8 rows),
    never rounded up to a full multiple of a huge tile.  The grid gets >= 2
    steps whenever there is enough work so v7x's second TensorCore is used.
    """
    n_sub = _round_up(max(n, 1), _SUBLANES)
    min_steps = 2 if n_sub >= 2 * _SUBLANES else 1
    g = max(_cdiv(n_sub, _MAX_BATCH_TILE), min_steps)
    tm = _round_up(_cdiv(n_sub, g), _SUBLANES)
    g = _cdiv(n_sub, tm)
    return tm, g, g * tm


# ---------------------------------------------------------------------------
# Fused MLP kernel: layer 0 on the VPU, hidden/last Linear on the MXU, tanh
# on the EUP; everything stays in vregs/VMEM between layers.
# ---------------------------------------------------------------------------
def _make_mlp_kernel(num_linear):
    def kernel(x_ref, *refs):
        o_ref = refs[-1]
        p_refs = refs[:-1]                 # w0, b0, w1, b1, ..., w_{L-1}, b_{L-1}
        x = x_ref[...].astype(jnp.float32)  # (TM, cin) — real width, no lane padding

        # ---- Layer 0: cin (==2) broadcast-FMAs on the VPU, no padded-K matmul.
        w0 = p_refs[0][...]                # (cin, h1_pad) f32
        b0 = p_refs[1][...]                # (1,  h1_pad) f32
        cin = w0.shape[0]
        h = b0 + x[:, 0:1] * w0[0:1, :]
        for c in range(1, cin):
            h = h + x[:, c:c + 1] * w0[c:c + 1, :]
        if num_linear > 1:
            h = jnp.tanh(h)

        # ---- Hidden + final Linear layers on the MXU (f32 accumulate).
        for i in range(1, num_linear):
            w = p_refs[2 * i][...]          # (h_prev_pad, h_next_pad_or_cout)
            b = p_refs[2 * i + 1][...]      # (1, h_next_pad_or_cout) f32
            prec = (lax.Precision.HIGHEST if w.dtype == jnp.float32
                    else lax.Precision.DEFAULT)
            h = jnp.dot(h.astype(w.dtype), w,
                        precision=prec,
                        preferred_element_type=jnp.float32) + b
            if i < num_linear - 1:
                h = jnp.tanh(h)

        o_ref[...] = h.astype(o_ref.dtype)  # (TM, cout) — real output width
    return kernel


# ---------------------------------------------------------------------------
# Parameter construction (PyTorch nn.Linear default init, deterministic).
# Padded/transposed layouts are built ONCE here, not per forward.
#   * layer 0 weight: (cin, h1_pad) f32 (VPU path, real K)
#   * hidden weights: (128-padded, 128-padded) in `compute_dtype`
#   * last weight:    (128-padded, cout) in `compute_dtype` (real Cout)
#   * biases:         (1, width) f32 (added after f32 accumulation)
# ---------------------------------------------------------------------------
def init_params(neurons, key, compute_dtype=jnp.float32):
    assert neurons[0] == 2, "Burgers_PINN_1d requires neurons[0] == 2 (x, t)"
    num_linear = len(neurons) - 1
    ws, bs, w_pads, b_pads = [], [], [], []
    for i in range(num_linear):
        cin, cout = neurons[i], neurons[i + 1]
        key, kw, kb = jax.random.split(key, 3)
        bound = 1.0 / math.sqrt(cin)
        w = jax.random.uniform(kw, (cout, cin), jnp.float32, -bound, bound)
        b = jax.random.uniform(kb, (cout,), jnp.float32, -bound, bound)

        cin_p = cin if i == 0 else _round_up(cin, _LANES)
        cout_p = cout if i == num_linear - 1 else _round_up(cout, _LANES)
        w_dtype = jnp.float32 if i == 0 else compute_dtype

        # Pre-transposed to (Cin, Cout); padded rows/cols stay exactly zero so
        # garbage never leaks into live columns.
        w_pad = jnp.zeros((cin_p, cout_p), w_dtype).at[:cin, :cout].set(
            w.T.astype(w_dtype))
        b_pad = jnp.zeros((1, cout_p), jnp.float32).at[0, :cout].set(b)

        ws.append(w)
        bs.append(b)
        w_pads.append(w_pad)
        b_pads.append(b_pad)
    return {"neurons": tuple(neurons), "w": ws, "b": bs,
            "w_pad": w_pads, "b_pad": b_pads}


# ---------------------------------------------------------------------------
# Forward wrapper: one fused pallas_call, tiled only over batch.
# ---------------------------------------------------------------------------
def burgers_pinn_forward(x, params):
    """Pallas implementation of Burgers_PINN_1d.forward (the MLP)."""
    neurons = params["neurons"]
    w_pads, b_pads = params["w_pad"], params["b_pad"]
    num_linear = len(w_pads)

    n, cin = x.shape
    assert cin == neurons[0]
    cout = neurons[-1]

    tm, grid, n_pad = _choose_batch_tiling(n)

    x = x.astype(jnp.float32)
    if n_pad != n:
        # Tiny (n_pad, 2) zero-pad of the tail rows only (sliced off below).
        x_in = jnp.zeros((n_pad, cin), jnp.float32).at[:n, :].set(x)
    else:
        x_in = x

    flat_params = []
    for w, b in zip(w_pads, b_pads):
        flat_params += [w, b]

    # Tiny parameters: fully resident in VMEM, no per-step double-buffering.
    vmem_full = pl.BlockSpec(memory_space=pltpu.MemorySpace.VMEM)

    out = pl.pallas_call(
        _make_mlp_kernel(num_linear),
        out_shape=jax.ShapeDtypeStruct((n_pad, cout), jnp.float32),
        grid=(grid,),
        in_specs=[pl.BlockSpec((tm, cin), lambda i: (i, 0))]
                 + [vmem_full] * len(flat_params),
        out_specs=pl.BlockSpec((tm, cout), lambda i: (i, 0)),
        compiler_params=pltpu.CompilerParams(
            dimension_semantics=("parallel",)),
    )(x_in, *flat_params)

    return out[:n]


# Pure-JAX reference (unpadded PyTorch-layout f32 params) for a sanity check.
def burgers_pinn_forward_ref(x, params):
    h = x
    num_linear = len(params["w"])
    for i, (w, b) in enumerate(zip(params["w"], params["b"])):
        h = h @ w.T + b
        if i < num_linear - 1:
            h = jnp.tanh(h)
    return h


if __name__ == "__main__":
    # Small shapes consistent with the module: neurons[0]=2 (x,t), two hidden
    # layers of width 32, scalar output u(x,t); batch = 8 collocation points.
    neurons = [2, 32, 32, 1]
    batch = 8

    key = jax.random.PRNGKey(0)
    key, kx = jax.random.split(key)
    x = jax.random.uniform(kx, (batch, neurons[0]), jnp.float32)  # (x, t) points

    # f32 path (HIGHEST matmul precision) — reference accuracy for PINN grads.
    params_f32 = init_params(neurons, key, compute_dtype=jnp.float32)
    out = burgers_pinn_forward(x, params_f32)
    out = jax.block_until_ready(out)
    ref = burgers_pinn_forward_ref(x, params_f32)
    assert out.shape == (batch, neurons[-1])
    assert jnp.allclose(out, ref, atol=1e-5, rtol=1e-5), "f32 mismatch vs reference"

    # bf16-operand MXU path (v6e/v7x fast path), f32 accumulation.
    params_bf16 = init_params(neurons, key, compute_dtype=jnp.bfloat16)
    out_bf16 = burgers_pinn_forward(x, params_bf16)
    out_bf16 = jax.block_until_ready(out_bf16)
    assert out_bf16.shape == (batch, neurons[-1])
    assert jnp.allclose(out_bf16, ref, atol=5e-2, rtol=5e-2), "bf16 mismatch vs reference"

    print("KERNEL_OK")
</pallas_src>

<mosaic_0001>
module attributes {stable_mosaic.version = 11 : i64} {
  func.func @kernel(%arg0: i32, %arg1: memref<8x2xf32, #tpu.memory_space<vmem>>, %arg2: memref<2x128xf32, #tpu.memory_space<vmem>>, %arg3: memref<1x128xf32, #tpu.memory_space<vmem>>, %arg4: memref<128x128xf32, #tpu.memory_space<vmem>>, %arg5: memref<1x128xf32, #tpu.memory_space<vmem>>, %arg6: memref<128x1xf32, #tpu.memory_space<vmem>>, %arg7: memref<1x1xf32, #tpu.memory_space<vmem>>, %arg8: memref<8x1xf32, #tpu.memory_space<vmem>>) attributes {dimension_semantics = [#tpu.dimension_semantics<parallel>], iteration_bounds = array<i64: 1>, scalar_prefetch = 0 : i64, scratch_operands = 0 : i64, tpu.core_type = #tpu.core_type<tc>, window_params = [{transform_indices = @transform_0, window_bounds = array<i64: 8, 2>}, {pipeline_mode = #tpu.pipeline_mode<synchronous>, transform_indices = @transform_1, window_bounds = array<i64: 2, 128>}, {pipeline_mode = #tpu.pipeline_mode<synchronous>, transform_indices = @transform_2, window_bounds = array<i64: 1, 128>}, {pipeline_mode = #tpu.pipeline_mode<synchronous>, transform_indices = @transform_3, window_bounds = array<i64: 128, 128>}, {pipeline_mode = #tpu.pipeline_mode<synchronous>, transform_indices = @transform_4, window_bounds = array<i64: 1, 128>}, {pipeline_mode = #tpu.pipeline_mode<synchronous>, transform_indices = @transform_5, window_bounds = array<i64: 128, 1>}, {pipeline_mode = #tpu.pipeline_mode<synchronous>, transform_indices = @transform_6, window_bounds = array<i64: 1, 1>}, {transform_indices = @transform_7, window_bounds = array<i64: 8, 1>}]} {
    %c0 = arith.constant 0 : index
    %c0_0 = arith.constant 0 : index
    %0 = vector.load %arg1[%c0, %c0_0] : memref<8x2xf32, #tpu.memory_space<vmem>>, vector<8x2xf32>
    %c0_1 = arith.constant 0 : index
    %c0_2 = arith.constant 0 : index
    %1 = vector.load %arg2[%c0_1, %c0_2] : memref<2x128xf32, #tpu.memory_space<vmem>>, vector<2x128xf32>
    %c0_3 = arith.constant 0 : index
    %c0_4 = arith.constant 0 : index
    %2 = vector.load %arg3[%c0_3, %c0_4] : memref<1x128xf32, #tpu.memory_space<vmem>>, vector<1x128xf32>
    %3 = vector.extract_strided_slice %0 {offsets = [0, 0], sizes = [8, 1], strides = [1, 1]} : vector<8x2xf32> to vector<8x1xf32>
    %4 = vector.extract_strided_slice %1 {offsets = [0, 0], sizes = [1, 128], strides = [1, 1]} : vector<2x128xf32> to vector<1x128xf32>
    %5 = vector.broadcast %3 : vector<8x1xf32> to vector<8x128xf32>
    %6 = vector.broadcast %4 : vector<1x128xf32> to vector<8x128xf32>
    %7 = arith.mulf %5, %6 : vector<8x128xf32>
    %8 = vector.broadcast %2 : vector<1x128xf32> to vector<8x128xf32>
    %9 = arith.addf %8, %7 : vector<8x128xf32>
    %10 = vector.extract_strided_slice %0 {offsets = [0, 1], sizes = [8, 1], strides = [1, 1]} : vector<8x2xf32> to vector<8x1xf32>
    %11 = vector.extract_strided_slice %1 {offsets = [1, 0], sizes = [1, 128], strides = [1, 1]} : vector<2x128xf32> to vector<1x128xf32>
    %12 = vector.broadcast %10 : vector<8x1xf32> to vector<8x128xf32>
    %13 = vector.broadcast %11 : vector<1x128xf32> to vector<8x128xf32>
    %14 = arith.mulf %12, %13 : vector<8x128xf32>
    %15 = arith.addf %9, %14 : vector<8x128xf32>
    %16 = math.tanh %15 : vector<8x128xf32>
    %c0_5 = arith.constant 0 : index
    %c0_6 = arith.constant 0 : index
    %17 = vector.load %arg4[%c0_5, %c0_6] : memref<128x128xf32, #tpu.memory_space<vmem>>, vector<128x128xf32>
    %c0_7 = arith.constant 0 : index
    %c0_8 = arith.constant 0 : index
    %18 = vector.load %arg5[%c0_7, %c0_8] : memref<1x128xf32, #tpu.memory_space<vmem>>, vector<1x128xf32>
    %cst = arith.constant dense<0.000000e+00> : vector<8x128xf32>
    %19 = tpu.matmul %16, %17, %cst {dimension_numbers = #tpu.dot_dimension_numbers<[1], [0], [0], [1], [0, 0, 1, 1], [], []>, precision = #tpu.contract_precision<fp32>} : vector<8x128xf32>, vector<128x128xf32>, vector<8x128xf32> -> vector<8x128xf32>
    %20 = vector.broadcast %18 : vector<1x128xf32> to vector<8x128xf32>
    %21 = arith.addf %19, %20 : vector<8x128xf32>
    %22 = math.tanh %21 : vector<8x128xf32>
    %c0_9 = arith.constant 0 : index
    %c0_10 = arith.constant 0 : index
    %23 = vector.load %arg6[%c0_9, %c0_10] : memref<128x1xf32, #tpu.memory_space<vmem>>, vector<128x1xf32>
    %c0_11 = arith.constant 0 : index
    %c0_12 = arith.constant 0 : index
    %24 = vector.load %arg7[%c0_11, %c0_12] : memref<1x1xf32, #tpu.memory_space<vmem>>, vector<1x1xf32>
    %cst_13 = arith.constant dense<0.000000e+00> : vector<8x1xf32>
    %25 = tpu.matmul %22, %23, %cst_13 {dimension_numbers = #tpu.dot_dimension_numbers<[1], [0], [0], [1], [0, 0, 1, 1], [], []>, precision = #tpu.contract_precision<fp32>} : vector<8x128xf32>, vector<128x1xf32>, vector<8x1xf32> -> vector<8x1xf32>
    %26 = vector.broadcast %24 : vector<1x1xf32> to vector<8x1xf32>
    %27 = arith.addf %25, %26 : vector<8x1xf32>
    %c0_14 = arith.constant 0 : index
    %c0_15 = arith.constant 0 : index
    %28 = vector.load %arg8[%c0_14, %c0_15] : memref<8x1xf32, #tpu.memory_space<vmem>>, vector<8x1xf32>
    tpu.vector_store %arg8[%c0_14, %c0_15], %27 {strides = array<i32>} : memref<8x1xf32, #tpu.memory_space<vmem>>, vector<8x1xf32>,
    return
  }
  func.func @transform_0(%arg0: i32) -> (i32, i32) {
    %c0_i32 = arith.constant 0 : i32
    %c0_i32_0 = arith.constant 0 : i32
    return %arg0, %c0_i32 : i32, i32
  }
  func.func @transform_1(%arg0: i32) -> (i32, i32) {
    %c0_i32 = arith.constant 0 : i32
    %c0_i32_0 = arith.constant 0 : i32
    %c0_i32_1 = arith.constant 0 : i32
    return %c0_i32, %c0_i32_0 : i32, i32
  }
  func.func @transform_2(%arg0: i32) -> (i32, i32) {
    %c0_i32 = arith.constant 0 : i32
    %c0_i32_0 = arith.constant 0 : i32
    %c0_i32_1 = arith.constant 0 : i32
    return %c0_i32, %c0_i32_0 : i32, i32
  }
  func.func @transform_3(%arg0: i32) -> (i32, i32) {
    %c0_i32 = arith.constant 0 : i32
    %c0_i32_0 = arith.constant 0 : i32
    %c0_i32_1 = arith.constant 0 : i32
    return %c0_i32, %c0_i32_0 : i32, i32
  }
  func.func @transform_4(%arg0: i32) -> (i32, i32) {
    %c0_i32 = arith.constant 0 : i32
    %c0_i32_0 = arith.constant 0 : i32
    %c0_i32_1 = arith.constant 0 : i32
    return %c0_i32, %c0_i32_0 : i32, i32
  }
  func.func @transform_5(%arg0: i32) -> (i32, i32) {
    %c0_i32 = arith.constant 0 : i32
    %c0_i32_0 = arith.constant 0 : i32
    %c0_i32_1 = arith.constant 0 : i32
    return %c0_i32, %c0_i32_0 : i32, i32
  }
  func.func @transform_6(%arg0: i32) -> (i32, i32) {
    %c0_i32 = arith.constant 0 : i32
    %c0_i32_0 = arith.constant 0 : i32
    %c0_i32_1 = arith.constant 0 : i32
    return %c0_i32, %c0_i32_0 : i32, i32
  }
  func.func @transform_7(%arg0: i32) -> (i32, i32) {
    %c0_i32 = arith.constant 0 : i32
    %c0_i32_0 = arith.constant 0 : i32
    return %arg0, %c0_i32 : i32, i32
  }
}

</mosaic_0001>

<llo_original>
// kernel: tpu_custom_call.1
$region0: #{tpu_custom_call.1}
  #allocation0 [shape = 'u32[]', space=smem, size = 0x4, offset = 0x4, fixed_abs, tag = 'smem constant byte address 0x4 - core index']
  #allocation1 [shape = 'u32[72,128]{1,0:T(1,128)}', space=vmem, size = 0x9000, scoped, tag = 'internal scratch']
  #allocation2 [shape = 'f32[1,1]{1,0:T(1,128)S(1)}', space=vmem, size = 0x200, scoped, tag = 'scoped memory for tpu_custom_call.1']
  %s0 = inlined_call_operand.vmem [shape: f32[8,2], index: 0, kind: input, shape index: {}]
  %s1 = inlined_call_operand.vmem [shape: f32[2,128], index: 1, kind: input, shape index: {}]
  %s2 = inlined_call_operand.vmem [shape: f32[1,128], index: 2, kind: input, shape index: {}]
  %s3 = inlined_call_operand.vmem [shape: f32[128,128], index: 3, kind: input, shape index: {}]
  %s4 = inlined_call_operand.vmem [shape: f32[1,128], index: 4, kind: input, shape index: {}]
  %s5 = inlined_call_operand.vmem [shape: f32[128,1], index: 5, kind: input, shape index: {}]
  %s6 = inlined_call_operand.<no memory space> [shape: f32[1,1], index: 6, kind: input, shape index: {}]
  %s7 = inlined_call_operand.vmem [shape: f32[8,1], index: 7, kind: output, shape index: {}]
  %s8 = sld [smem:[#allocation0]]
  $region38: #{tpu_custom_call.1} parent=0
    _
  %s10 = ssub.s32 1, %s8
  %s11 = scalar_select 0, %s10, %s8
  %v12 = vstv %s6
  %13 = vst [vmem:[#allocation2] sm:$0x1] %v12
  // Predicated region
  $region2: #{tpu_custom_call.1} parent=0 // pred_check
    _
  $region3: #{tpu_custom_call.1} parent=0 // pred_check_branch
    %15 = sbr.rel (0) target = $region5
  $region4: #{tpu_custom_call.1} parent=0 // pred_region
    _
  $region5: #{tpu_custom_call.1} parent=0 // pred_fallthru
    _
  // Predicated region
  $region6: #{tpu_custom_call.1} parent=0 // pred_check
    _
  $region7: #{tpu_custom_call.1} parent=0 // pred_check_branch
    %17 = sbr.rel (0) target = $region9
  $region8: #{tpu_custom_call.1} parent=0 // pred_region
    _
  $region9: #{tpu_custom_call.1} parent=0 // pred_fallthru
    _
  // Predicated region
  $region10: #{tpu_custom_call.1} parent=0 // pred_check
    _
  $region11: #{tpu_custom_call.1} parent=0 // pred_check_branch
    %19 = sbr.rel (0) target = $region13
  $region12: #{tpu_custom_call.1} parent=0 // pred_region
    _
  $region13: #{tpu_custom_call.1} parent=0 // pred_fallthru
    _
  // Predicated region
  $region14: #{tpu_custom_call.1} parent=0 // pred_check
    _
  $region15: #{tpu_custom_call.1} parent=0 // pred_check_branch
    %21 = sbr.rel (0) target = $region17
  $region16: #{tpu_custom_call.1} parent=0 // pred_region
    _
  $region17: #{tpu_custom_call.1} parent=0 // pred_fallthru
    _
  // Predicated region
  $region18: #{tpu_custom_call.1} parent=0 // pred_check
    _
  $region19: #{tpu_custom_call.1} parent=0 // pred_check_branch
    %23 = sbr.rel (0) target = $region21
  $region20: #{tpu_custom_call.1} parent=0 // pred_region
    _
  $region21: #{tpu_custom_call.1} parent=0 // pred_fallthru
    _
  // Predicated region
  $region22: #{tpu_custom_call.1} parent=0 // pred_check
    _
  $region23: #{tpu_custom_call.1} parent=0 // pred_check_branch
    %25 = sbr.rel (0) target = $region25
  $region24: #{tpu_custom_call.1} parent=0 // pred_region
    _
  $region25: #{tpu_custom_call.1} parent=0 // pred_fallthru
    _
  // Predicated region
  $region26: #{tpu_custom_call.1} parent=0 // pred_check
    _
  $region27: #{tpu_custom_call.1} parent=0 // pred_check_branch
    %27 = sbr.rel (0) target = $region29
  $region28: #{tpu_custom_call.1} parent=0 // pred_region
    _
  $region29: #{tpu_custom_call.1} parent=0 // pred_fallthru
    _
  %v28 = vld [vmem:[%s0] sm:$0xff]
  %v29 = vld [vmem:[%s1] sm:$0x3]
  %v30 = vld [vmem:[%s2] sm:$0x1]
  %32 = vset.pattern.permute.xlu0 0
  %33 = vperm.xlu0 %32, %v28
  %v34 = vpop.permute.xlu0 %33
  %v36 = vperm.slane %v29, 0
  %v37 = vmul.f32 %v34, %v36
  %v39 = vperm.slane %v30, 0
  %v41 = vadd.f32 %v39, %v37
  %42 = vset.pattern.permute.xlu0 1
  %43 = vperm.xlu0 %42, %v28
  %v44 = vpop.permute.xlu0 %43
  %v46 = vperm.slane %v29, 1
  %v47 = vmul.f32 %v44, %v46
  %v48 = vadd.f32 %v41, %v47
  %v49 = vtanh.pop %v48
  %v50 = vld [vmem:[%s3] sm:$0xff]
  %v51 = vld [vmem:[%s3 + $0x8] sm:$0xff]
  %v52 = vld [vmem:[%s3 + $0x10] sm:$0xff]
  %v53 = vld [vmem:[%s3 + $0x18] sm:$0xff]
  %v54 = vld [vmem:[%s3 + $0x20] sm:$0xff]
  %v55 = vld [vmem:[%s3 + $0x28] sm:$0xff]
  %v56 = vld [vmem:[%s3 + $0x30] sm:$0xff]
  %v57 = vld [vmem:[%s3 + $0x38] sm:$0xff]
  %v58 = vld [vmem:[%s3 + $0x40] sm:$0xff]
  %v59 = vld [vmem:[%s3 + $0x48] sm:$0xff]
  %v60 = vld [vmem:[%s3 + $0x50] sm:$0xff]
  %v61 = vld [vmem:[%s3 + $0x58] sm:$0xff]
  %v62 = vld [vmem:[%s3 + $0x60] sm:$0xff]
  %v63 = vld [vmem:[%s3 + $0x68] sm:$0xff]
  %v64 = vld [vmem:[%s3 + $0x70] sm:$0xff]
  %v65 = vld [vmem:[%s3 + $0x78] sm:$0xff]
  %v66 = vld [vmem:[%s4] sm:$0x1]
  %v68 = vperm.slane %v66, 0
  %v70 = vand.u32 %v65, 4294901760
  %71 = vmatpush.msra.mxu0 %v70
  %v72 = vand.u32 %v64, 4294901760
  %73 = vmatpush.msra.mxu0 %v72
  %v74 = vand.u32 %v63, 4294901760
  %75 = vmatpush.msra.mxu0 %v74
  %v76 = vand.u32 %v62, 4294901760
  %77 = vmatpush.msra.mxu0 %v76
  %v78 = vand.u32 %v61, 4294901760
  %79 = vmatpush.msra.mxu0 %v78
  %v80 = vand.u32 %v60, 4294901760
  %81 = vmatpush.msra.mxu0 %v80
  %v82 = vand.u32 %v59, 4294901760
  %83 = vmatpush.msra.mxu0 %v82
  %v84 = vand.u32 %v58, 4294901760
  %85 = vmatpush.msra.mxu0 %v84
  %v86 = vand.u32 %v57, 4294901760
  %87 = vmatpush.msra.mxu0 %v86
  %v88 = vand.u32 %v56, 4294901760
  %89 = vmatpush.msra.mxu0 %v88
  %v90 = vand.u32 %v55, 4294901760
  %91 = vmatpush.msra.mxu0 %v90
  %v92 = vand.u32 %v54, 4294901760
  %93 = vmatpush.msra.mxu0 %v92
  %v94 = vand.u32 %v53, 4294901760
  %95 = vmatpush.msra.mxu0 %v94
  %v96 = vand.u32 %v52, 4294901760
  %97 = vmatpush.msra.mxu0 %v96
  %v98 = vand.u32 %v51, 4294901760
  %99 = vmatpush.msra.mxu0 %v98
  %v100 = vand.u32 %v50, 4294901760
  %101 = vmatpush.msra.mxu0 %v100
  %v102 = vand.u32 %v49, 4294901760
  %v103 = vsub.f32 %v49, %v102
  %v104 = vand.u32 %v103, 4294901760
  %v105 = vsub.f32 %v103, %v104
  %v106 = vand.u32 %v105, 4294901760
  %107 = vmatmul.f32.gmra.mxu0 %v106
  %v108 = vpop.f32.mrf.mxu0
  %v109 = vadd.f32 %v68, %v108
  %110 = vdwg.mxu0
  %v111 = vand.u32 %v65, 4294901760
  %v112 = vsub.f32 %v65, %v111
  %v113 = vand.u32 %v112, 4294901760
  %v114 = vsub.f32 %v112, %v113
  %v115 = vand.u32 %v114, 4294901760
  %116 = vmatpush.msra.mxu0 %v115
  %v117 = vand.u32 %v64, 4294901760
  %v118 = vsub.f32 %v64, %v117
  %v119 = vand.u32 %v118, 4294901760
  %v120 = vsub.f32 %v118, %v119
  %v121 = vand.u32 %v120, 4294901760
  %122 = vmatpush.msra.mxu0 %v121
  %v123 = vand.u32 %v63, 4294901760
  %v124 = vsub.f32 %v63, %v123
  %v125 = vand.u32 %v124, 4294901760
  %v126 = vsub.f32 %v124, %v125
  %v127 = vand.u32 %v126, 4294901760
  %128 = vmatpush.msra.mxu0 %v127
  %v129 = vand.u32 %v62, 4294901760
  %v130 = vsub.f32 %v62, %v129
  %v131 = vand.u32 %v130, 4294901760
  %v132 = vsub.f32 %v130, %v131
  %v133 = vand.u32 %v132, 4294901760
  %134 = vmatpush.msra.mxu0 %v133
  %v135 = vand.u32 %v61, 4294901760
  %v136 = vsub.f32 %v61, %v135
  %v137 = vand.u32 %v136, 4294901760
  %v138 = vsub.f32 %v136, %v137
  %v139 = vand.u32 %v138, 4294901760
  %140 = vmatpush.msra.mxu0 %v139
  %v141 = vand.u32 %v60, 4294901760
  %v142 = vsub.f32 %v60, %v141
  %v143 = vand.u32 %v142, 4294901760
  %v144 = vsub.f32 %v142, %v143
  %v145 = vand.u32 %v144, 4294901760
  %146 = vmatpush.msra.mxu0 %v145
  %v147 = vand.u32 %v59, 4294901760
  %v148 = vsub.f32 %v59, %v147
  %v149 = vand.u32 %v148, 4294901760
  %v150 = vsub.f32 %v148, %v149
  %v151 = vand.u32 %v150, 4294901760
  %152 = vmatpush.msra.mxu0 %v151
  %v153 = vand.u32 %v58, 4294901760
  %v154 = vsub.f32 %v58, %v153
  %v155 = vand.u32 %v154, 4294901760
  %v156 = vsub.f32 %v154, %v155
  %v157 = vand.u32 %v156, 4294901760
  %158 = vmatpush.msra.mxu0 %v157
  %v159 = vand.u32 %v57, 4294901760
  %v160 = vsub.f32 %v57, %v159
  %v161 = vand.u32 %v160, 4294901760
  %v162 = vsub.f32 %v160, %v161
  %v163 = vand.u32 %v162, 4294901760
  %164 = vmatpush.msra.mxu0 %v163
  %v165 = vand.u32 %v56, 4294901760
  %v166 = vsub.f32 %v56, %v165
  %v167 = vand.u32 %v166, 4294901760
  %v168 = vsub.f32 %v166, %v167
  %v169 = vand.u32 %v168, 4294901760
  %170 = vmatpush.msra.mxu0 %v169
  %v171 = vand.u32 %v55, 4294901760
  %v172 = vsub.f32 %v55, %v171
  %v173 = vand.u32 %v172, 4294901760
  %v174 = vsub.f32 %v172, %v173
  %v175 = vand.u32 %v174, 4294901760
  %176 = vmatpush.msra.mxu0 %v175
  %v177 = vand.u32 %v54, 4294901760
  %v178 = vsub.f32 %v54, %v177
  %v179 = vand.u32 %v178, 4294901760
  %v180 = vsub.f32 %v178, %v179
  %v181 = vand.u32 %v180, 4294901760
  %182 = vmatpush.msra.mxu0 %v181
  %v183 = vand.u32 %v53, 4294901760
  %v184 = vsub.f32 %v53, %v183
  %v185 = vand.u32 %v184, 4294901760
  %v186 = vsub.f32 %v184, %v185
  %v187 = vand.u32 %v186, 4294901760
  %188 = vmatpush.msra.mxu0 %v187
  %v189 = vand.u32 %v52, 4294901760
  %v190 = vsub.f32 %v52, %v189
  %v191 = vand.u32 %v190, 4294901760
  %v192 = vsub.f32 %v190, %v191
  %v193 = vand.u32 %v192, 4294901760
  %194 = vmatpush.msra.mxu0 %v193
  %v195 = vand.u32 %v51, 4294901760
  %v196 = vsub.f32 %v51, %v195
  %v197 = vand.u32 %v196, 4294901760
  %v198 = vsub.f32 %v196, %v197
  %v199 = vand.u32 %v198, 4294901760
  %200 = vmatpush.msra.mxu0 %v199
  %v201 = vand.u32 %v50, 4294901760
  %v202 = vsub.f32 %v50, %v201
  %v203 = vand.u32 %v202, 4294901760
  %v204 = vsub.f32 %v202, %v203
  %v205 = vand.u32 %v204, 4294901760
  %206 = vmatpush.msra.mxu0 %v205
  %v207 = vand.u32 %v49, 4294901760
  %208 = vmatmul.f32.gmra.mxu0 %v207
  %v209 = vpop.f32.mrf.mxu0
  %v210 = vadd.f32 %v109, %v209
  %211 = vdwg.mxu0
  %v212 = vand.u32 %v65, 4294901760
  %v213 = vsub.f32 %v65, %v212
  %214 = vmatpush.msra.mxu0 %v213
  %v215 = vand.u32 %v64, 4294901760
  %v216 = vsub.f32 %v64, %v215
  %217 = vmatpush.msra.mxu0 %v216
  %v218 = vand.u32 %v63, 4294901760
  %v219 = vsub.f32 %v63, %v218
  %220 = vmatpush.msra.mxu0 %v219
  %v221 = vand.u32 %v62, 4294901760
  %v222 = vsub.f32 %v62, %v221
  %223 = vmatpush.msra.mxu0 %v222
  %v224 = vand.u32 %v61, 4294901760
  %v225 = vsub.f32 %v61, %v224
  %226 = vmatpush.msra.mxu0 %v225
  %v227 = vand.u32 %v60, 4294901760
  %v228 = vsub.f32 %v60, %v227
  %229 = vmatpush.msra.mxu0 %v228
  %v230 = vand.u32 %v59, 4294901760
  %v231 = vsub.f32 %v59, %v230
  %232 = vmatpush.msra.mxu0 %v231
  %v233 = vand.u32 %v58, 4294901760
  %v234 = vsub.f32 %v58, %v233
  %235 = vmatpush.msra.mxu0 %v234
  %v236 = vand.u32 %v57, 4294901760
  %v237 = vsub.f32 %v57, %v236
  %238 = vmatpush.msra.mxu0 %v237
  %v239 = vand.u32 %v56, 4294901760
  %v240 = vsub.f32 %v56, %v239
  %241 = vmatpush.msra.mxu0 %v240
  %v242 = vand.u32 %v55, 4294901760
  %v243 = vsub.f32 %v55, %v242
  %244 = vmatpush.msra.mxu0 %v243
  %v245 = vand.u32 %v54, 4294901760
  %v246 = vsub.f32 %v54, %v245
  %247 = vmatpush.msra.mxu0 %v246
  %v248 = vand.u32 %v53, 4294901760
  %v249 = vsub.f32 %v53, %v248
  %250 = vmatpush.msra.mxu0 %v249
  %v251 = vand.u32 %v52, 4294901760
  %v252 = vsub.f32 %v52, %v251
  %253 = vmatpush.msra.mxu0 %v252
  %v254 = vand.u32 %v51, 4294901760
  %v255 = vsub.f32 %v51, %v254
  %256 = vmatpush.msra.mxu0 %v255
  %v257 = vand.u32 %v50, 4294901760
  %v258 = vsub.f32 %v50, %v257
  %259 = vmatpush.msra.mxu0 %v258
  %v260 = vand.u32 %v49, 4294901760
  %v261 = vsub.f32 %v49, %v260
  %262 = vmatmul.f32.gmra.mxu0 %v261
  %v263 = vpop.f32.mrf.mxu0
  %v264 = vadd.f32 %v210, %v263
  %265 = vdwg.mxu0
  %v266 = vand.u32 %v65, 4294901760
  %267 = vmatpush.msra.mxu0 %v266
  %v268 = vand.u32 %v64, 4294901760
  %269 = vmatpush.msra.mxu0 %v268
  %v270 = vand.u32 %v63, 4294901760
  %271 = vmatpush.msra.mxu0 %v270
  %v272 = vand.u32 %v62, 4294901760
  %273 = vmatpush.msra.mxu0 %v272
  %v274 = vand.u32 %v61, 4294901760
  %275 = vmatpush.msra.mxu0 %v274
  %v276 = vand.u32 %v60, 4294901760
  %277 = vmatpush.msra.mxu0 %v276
  %v278 = vand.u32 %v59, 4294901760
  %279 = vmatpush.msra.mxu0 %v278
  %v280 = vand.u32 %v58, 4294901760
  %281 = vmatpush.msra.mxu0 %v280
  %v282 = vand.u32 %v57, 4294901760
  %283 = vmatpush.msra.mxu0 %v282
  %v284 = vand.u32 %v56, 4294901760
  %285 = vmatpush.msra.mxu0 %v284
  %v286 = vand.u32 %v55, 4294901760
  %287 = vmatpush.msra.mxu0 %v286
  %v288 = vand.u32 %v54, 4294901760
  %289 = vmatpush.msra.mxu0 %v288
  %v290 = vand.u32 %v53, 4294901760
  %291 = vmatpush.msra.mxu0 %v290
  %v292 = vand.u32 %v52, 4294901760
  %293 = vmatpush.msra.mxu0 %v292
  %v294 = vand.u32 %v51, 4294901760
  %295 = vmatpush.msra.mxu0 %v294
  %v296 = vand.u32 %v50, 4294901760
  %297 = vmatpush.msra.mxu0 %v296
  %v298 = vand.u32 %v49, 4294901760
  %v299 = vsub.f32 %v49, %v298
  %v300 = vand.u32 %v299, 4294901760
  %301 = vmatmul.f32.gmra.mxu0 %v300
  %v302 = vpop.f32.mrf.mxu0
  %v303 = vadd.f32 %v264, %v302
  %304 = vdwg.mxu0
  %v305 = vand.u32 %v65, 4294901760
  %v306 = vsub.f32 %v65, %v305
  %v307 = vand.u32 %v306, 4294901760
  %308 = vmatpush.msra.mxu0 %v307
  %v309 = vand.u32 %v64, 4294901760
  %v310 = vsub.f32 %v64, %v309
  %v311 = vand.u32 %v310, 4294901760
  %312 = vmatpush.msra.mxu0 %v311
  %v313 = vand.u32 %v63, 4294901760
  %v314 = vsub.f32 %v63, %v313
  %v315 = vand.u32 %v314, 4294901760
  %316 = vmatpush.msra.mxu0 %v315
  %v317 = vand.u32 %v62, 4294901760
  %v318 = vsub.f32 %v62, %v317
  %v319 = vand.u32 %v318, 4294901760
  %320 = vmatpush.msra.mxu0 %v319
  %v321 = vand.u32 %v61, 4294901760
  %v322 = vsub.f32 %v61, %v321
  %v323 = vand.u32 %v322, 4294901760
  %324 = vmatpush.msra.mxu0 %v323
  %v325 = vand.u32 %v60, 4294901760
  %v326 = vsub.f32 %v60, %v325
  %v327 = vand.u32 %v326, 4294901760
  %328 = vmatpush.msra.mxu0 %v327
  %v329 = vand.u32 %v59, 4294901760
  %v330 = vsub.f32 %v59, %v329
  %v331 = vand.u32 %v330, 4294901760
  %332 = vmatpush.msra.mxu0 %v331
  %v333 = vand.u32 %v58, 4294901760
  %v334 = vsub.f32 %v58, %v333
  %v335 = vand.u32 %v334, 4294901760
  %336 = vmatpush.msra.mxu0 %v335
  %v337 = vand.u32 %v57, 4294901760
  %v338 = vsub.f32 %v57, %v337
  %v339 = vand.u32 %v338, 4294901760
  %340 = vmatpush.msra.mxu0 %v339
  %v341 = vand.u32 %v56, 4294901760
  %v342 = vsub.f32 %v56, %v341
  %v343 = vand.u32 %v342, 4294901760
  %344 = vmatpush.msra.mxu0 %v343
  %v345 = vand.u32 %v55, 4294901760
  %v346 = vsub.f32 %v55, %v345
  %v347 = vand.u32 %v346, 4294901760
  %348 = vmatpush.msra.mxu0 %v347
  %v349 = vand.u32 %v54, 4294901760
  %v350 = vsub.f32 %v54, %v349
  %v351 = vand.u32 %v350, 4294901760
  %352 = vmatpush.msra.mxu0 %v351
  %v353 = vand.u32 %v53, 4294901760
  %v354 = vsub.f32 %v53, %v353
  %v355 = vand.u32 %v354, 4294901760
  %356 = vmatpush.msra.mxu0 %v355
  %v357 = vand.u32 %v52, 4294901760
  %v358 = vsub.f32 %v52, %v357
  %v359 = vand.u32 %v358, 4294901760
  %360 = vmatpush.msra.mxu0 %v359
  %v361 = vand.u32 %v51, 4294901760
  %v362 = vsub.f32 %v51, %v361
  %v363 = vand.u32 %v362, 4294901760
  %364 = vmatpush.msra.mxu0 %v363
  %v365 = vand.u32 %v50, 4294901760
  %v366 = vsub.f32 %v50, %v365
  %v367 = vand.u32 %v366, 4294901760
  %368 = vmatpush.msra.mxu0 %v367
  %v369 = vand.u32 %v49, 4294901760
  %370 = vmatmul.f32.gmra.mxu0 %v369
  %v371 = vpop.f32.mrf.mxu0
  %v372 = vadd.f32 %v303, %v371
  %373 = vdwg.mxu0
  %v374 = vand.u32 %v65, 4294901760
  %375 = vmatpush.msra.mxu0 %v374
  %v376 = vand.u32 %v64, 4294901760
  %377 = vmatpush.msra.mxu0 %v376
  %v378 = vand.u32 %v63, 4294901760
  %379 = vmatpush.msra.mxu0 %v378
  %v380 = vand.u32 %v62, 4294901760
  %381 = vmatpush.msra.mxu0 %v380
  %v382 = vand.u32 %v61, 4294901760
  %383 = vmatpush.msra.mxu0 %v382
  %v384 = vand.u32 %v60, 4294901760
  %385 = vmatpush.msra.mxu0 %v384
  %v386 = vand.u32 %v59, 4294901760
  %387 = vmatpush.msra.mxu0 %v386
  %v388 = vand.u32 %v58, 4294901760
  %389 = vmatpush.msra.mxu0 %v388
  %v390 = vand.u32 %v57, 4294901760
  %391 = vmatpush.msra.mxu0 %v390
  %v392 = vand.u32 %v56, 4294901760
  %393 = vmatpush.msra.mxu0 %v392
  %v394 = vand.u32 %v55, 4294901760
  %395 = vmatpush.msra.mxu0 %v394
  %v396 = vand.u32 %v54, 4294901760
  %397 = vmatpush.msra.mxu0 %v396
  %v398 = vand.u32 %v53, 4294901760
  %399 = vmatpush.msra.mxu0 %v398
  %v400 = vand.u32 %v52, 4294901760
  %401 = vmatpush.msra.mxu0 %v400
  %v402 = vand.u32 %v51, 4294901760
  %403 = vmatpush.msra.mxu0 %v402
  %v404 = vand.u32 %v50, 4294901760
  %405 = vmatpush.msra.mxu0 %v404
  %v406 = vand.u32 %v49, 4294901760
  %407 = vmatmul.f32.gmra.mxu0 %v406
  %v408 = vpop.f32.mrf.mxu0
  %v409 = vadd.f32 %v372, %v408
  %410 = vdwg.mxu0
  %v411 = vtanh.pop %v409
  %v412 = vld [vmem:[%s5] sm:$0xff]
  %v413 = vld [vmem:[%s5 + $0x8] sm:$0xff]
  %v414 = vld [vmem:[%s5 + $0x10] sm:$0xff]
  %v415 = vld [vmem:[%s5 + $0x18] sm:$0xff]
  %v416 = vld [vmem:[%s5 + $0x20] sm:$0xff]
  %v417 = vld [vmem:[%s5 + $0x28] sm:$0xff]
  %v418 = vld [vmem:[%s5 + $0x30] sm:$0xff]
  %v419 = vld [vmem:[%s5 + $0x38] sm:$0xff]
  %v420 = vld [vmem:[%s5 + $0x40] sm:$0xff]
  %v421 = vld [vmem:[%s5 + $0x48] sm:$0xff]
  %v422 = vld [vmem:[%s5 + $0x50] sm:$0xff]
  %v423 = vld [vmem:[%s5 + $0x58] sm:$0xff]
  %v424 = vld [vmem:[%s5 + $0x60] sm:$0xff]
  %v425 = vld [vmem:[%s5 + $0x68] sm:$0xff]
  %v426 = vld [vmem:[%s5 + $0x70] sm:$0xff]
  %v427 = vld [vmem:[%s5 + $0x78] sm:$0xff]
  %v428 = vld [vmem:[#allocation2] sm:$0x1]
  %v430 = vperm.slane %v428, 0
  %v432 = vand.u32 %v427, 4294901760
  %433 = vmatpush.msra.mxu0 %v432
  %v434 = vand.u32 %v426, 4294901760
  %435 = vmatpush.msra.mxu0 %v434
  %v436 = vand.u32 %v425, 4294901760
  %437 = vmatpush.msra.mxu0 %v436
  %v438 = vand.u32 %v424, 4294901760
  %439 = vmatpush.msra.mxu0 %v438
  %v440 = vand.u32 %v423, 4294901760
  %441 = vmatpush.msra.mxu0 %v440
  %v442 = vand.u32 %v422, 4294901760
  %443 = vmatpush.msra.mxu0 %v442
  %v444 = vand.u32 %v421, 4294901760
  %445 = vmatpush.msra.mxu0 %v444
  %v446 = vand.u32 %v420, 4294901760
  %447 = vmatpush.msra.mxu0 %v446
  %v448 = vand.u32 %v419, 4294901760
  %449 = vmatpush.msra.mxu0 %v448
  %v450 = vand.u32 %v418, 4294901760
  %451 = vmatpush.msra.mxu0 %v450
  %v452 = vand.u32 %v417, 4294901760
  %453 = vmatpush.msra.mxu0 %v452
  %v454 = vand.u32 %v416, 4294901760
  %455 = vmatpush.msra.mxu0 %v454
  %v456 = vand.u32 %v415, 4294901760
  %457 = vmatpush.msra.mxu0 %v456
  %v458 = vand.u32 %v414, 4294901760
  %459 = vmatpush.msra.mxu0 %v458
  %v460 = vand.u32 %v413, 4294901760
  %461 = vmatpush.msra.mxu0 %v460
  %v462 = vand.u32 %v412, 4294901760
  %463 = vmatpush.msra.mxu0 %v462
  %v464 = vand.u32 %v411, 4294901760
  %v465 = vsub.f32 %v411, %v464
  %v466 = vand.u32 %v465, 4294901760
  %v467 = vsub.f32 %v465, %v466
  %v468 = vand.u32 %v467, 4294901760
  %469 = vmatmul.f32.gmra.mxu0 %v468
  %v470 = vpop.f32.mrf.mxu0
  %v471 = vadd.f32 %v430, %v470
  %472 = vdwg.mxu0
  %v473 = vand.u32 %v427, 4294901760
  %v474 = vsub.f32 %v427, %v473
  %v475 = vand.u32 %v474, 4294901760
  %v476 = vsub.f32 %v474, %v475
  %v477 = vand.u32 %v476, 4294901760
  %478 = vmatpush.msra.mxu0 %v477
  %v479 = vand.u32 %v426, 4294901760
  %v480 = vsub.f32 %v426, %v479
  %v481 = vand.u32 %v480, 4294901760
  %v482 = vsub.f32 %v480, %v481
  %v483 = vand.u32 %v482, 4294901760
  %484 = vmatpush.msra.mxu0 %v483
  %v485 = vand.u32 %v425, 4294901760
  %v486 = vsub.f32 %v425, %v485
  %v487 = vand.u32 %v486, 4294901760
  %v488 = vsub.f32 %v486, %v487
  %v489 = vand.u32 %v488, 4294901760
  %490 = vmatpush.msra.mxu0 %v489
  %v491 = vand.u32 %v424, 4294901760
  %v492 = vsub.f32 %v424, %v491
  %v493 = vand.u32 %v492, 4294901760
  %v494 = vsub.f32 %v492, %v493
  %v495 = vand.u32 %v494, 4294901760
  %496 = vmatpush.msra.mxu0 %v495
  %v497 = vand.u32 %v423, 4294901760
  %v498 = vsub.f32 %v423, %v497
  %v499 = vand.u32 %v498, 4294901760
  %v500 = vsub.f32 %v498, %v499
  %v501 = vand.u32 %v500, 4294901760
  %502 = vmatpush.msra.mxu0 %v501
  %v503 = vand.u32 %v422, 4294901760
  %v504 = vsub.f32 %v422, %v503
  %v505 = vand.u32 %v504, 4294901760
  %v506 = vsub.f32 %v504, %v505
  %v507 = vand.u32 %v506, 4294901760
  %508 = vmatpush.msra.mxu0 %v507
  %v509 = vand.u32 %v421, 4294901760
  %v510 = vsub.f32 %v421, %v509
  %v511 = vand.u32 %v510, 4294901760
  %v512 = vsub.f32 %v510, %v511
  %v513 = vand.u32 %v512, 4294901760
  %514 = vmatpush.msra.mxu0 %v513
  %v515 = vand.u32 %v420, 4294901760
  %v516 = vsub.f32 %v420, %v515
  %v517 = vand.u32 %v516, 4294901760
  %v518 = vsub.f32 %v516, %v517
  %v519 = vand.u32 %v518, 4294901760
  %520 = vmatpush.msra.mxu0 %v519
  %v521 = vand.u32 %v419, 4294901760
  %v522 = vsub.f32 %v419, %v521
  %v523 = vand.u32 %v522, 4294901760
  %v524 = vsub.f32 %v522, %v523
  %v525 = vand.u32 %v524, 4294901760
  %526 = vmatpush.msra.mxu0 %v525
  %v527 = vand.u32 %v418, 4294901760
  %v528 = vsub.f32 %v418, %v527
  %v529 = vand.u32 %v528, 4294901760
  %v530 = vsub.f32 %v528, %v529
  %v531 = vand.u32 %v530, 4294901760
  %532 = vmatpush.msra.mxu0 %v531
  %v533 = vand.u32 %v417, 4294901760
  %v534 = vsub.f32 %v417, %v533
  %v535 = vand.u32 %v534, 4294901760
  %v536 = vsub.f32 %v534, %v535
  %v537 = vand.u32 %v536, 4294901760
  %538 = vmatpush.msra.mxu0 %v537
  %v539 = vand.u32 %v416, 4294901760
  %v540 = vsub.f32 %v416, %v539
  %v541 = vand.u32 %v540, 4294901760
  %v542 = vsub.f32 %v540, %v541
  %v543 = vand.u32 %v542, 4294901760
  %544 = vmatpush.msra.mxu0 %v543
  %v545 = vand.u32 %v415, 4294901760
  %v546 = vsub.f32 %v415, %v545
  %v547 = vand.u32 %v546, 4294901760
  %v548 = vsub.f32 %v546, %v547
  %v549 = vand.u32 %v548, 4294901760
  %550 = vmatpush.msra.mxu0 %v549
  %v551 = vand.u32 %v414, 4294901760
  %v552 = vsub.f32 %v414, %v551
  %v553 = vand.u32 %v552, 4294901760
  %v554 = vsub.f32 %v552, %v553
  %v555 = vand.u32 %v554, 4294901760
  %556 = vmatpush.msra.mxu0 %v555
  %v557 = vand.u32 %v413, 4294901760
  %v558 = vsub.f32 %v413, %v557
  %v559 = vand.u32 %v558, 4294901760
  %v560 = vsub.f32 %v558, %v559
  %v561 = vand.u32 %v560, 4294901760
  %562 = vmatpush.msra.mxu0 %v561
  %v563 = vand.u32 %v412, 4294901760
  %v564 = vsub.f32 %v412, %v563
  %v565 = vand.u32 %v564, 4294901760
  %v566 = vsub.f32 %v564, %v565
  %v567 = vand.u32 %v566, 4294901760
  %568 = vmatpush.msra.mxu0 %v567
  %v569 = vand.u32 %v411, 4294901760
  %570 = vmatmul.f32.gmra.mxu0 %v569
  %v571 = vpop.f32.mrf.mxu0
  %v572 = vadd.f32 %v471, %v571
  %573 = vdwg.mxu0
  %v574 = vand.u32 %v427, 4294901760
  %v575 = vsub.f32 %v427, %v574
  %576 = vmatpush.msra.mxu0 %v575
  %v577 = vand.u32 %v426, 4294901760
  %v578 = vsub.f32 %v426, %v577
  %579 = vmatpush.msra.mxu0 %v578
  %v580 = vand.u32 %v425, 4294901760
  %v581 = vsub.f32 %v425, %v580
  %582 = vmatpush.msra.mxu0 %v581
  %v583 = vand.u32 %v424, 4294901760
  %v584 = vsub.f32 %v424, %v583
  %585 = vmatpush.msra.mxu0 %v584
  %v586 = vand.u32 %v423, 4294901760
  %v587 = vsub.f32 %v423, %v586
  %588 = vmatpush.msra.mxu0 %v587
  %v589 = vand.u32 %v422, 4294901760
  %v590 = vsub.f32 %v422, %v589
  %591 = vmatpush.msra.mxu0 %v590
  %v592 = vand.u32 %v421, 4294901760
  %v593 = vsub.f32 %v421, %v592
  %594 = vmatpush.msra.mxu0 %v593
  %v595 = vand.u32 %v420, 4294901760
  %v596 = vsub.f32 %v420, %v595
  %597 = vmatpush.msra.mxu0 %v596
  %v598 = vand.u32 %v419, 4294901760
  %v599 = vsub.f32 %v419, %v598
  %600 = vmatpush.msra.mxu0 %v599
  %v601 = vand.u32 %v418, 4294901760
  %v602 = vsub.f32 %v418, %v601
  %603 = vmatpush.msra.mxu0 %v602
  %v604 = vand.u32 %v417, 4294901760
  %v605 = vsub.f32 %v417, %v604
  %606 = vmatpush.msra.mxu0 %v605
  %v607 = vand.u32 %v416, 4294901760
  %v608 = vsub.f32 %v416, %v607
  %609 = vmatpush.msra.mxu0 %v608
  %v610 = vand.u32 %v415, 4294901760
  %v611 = vsub.f32 %v415, %v610
  %612 = vmatpush.msra.mxu0 %v611
  %v613 = vand.u32 %v414, 4294901760
  %v614 = vsub.f32 %v414, %v613
  %615 = vmatpush.msra.mxu0 %v614
  %v616 = vand.u32 %v413, 4294901760
  %v617 = vsub.f32 %v413, %v616
  %618 = vmatpush.msra.mxu0 %v617
  %v619 = vand.u32 %v412, 4294901760
  %v620 = vsub.f32 %v412, %v619
  %621 = vmatpush.msra.mxu0 %v620
  %v622 = vand.u32 %v411, 4294901760
  %v623 = vsub.f32 %v411, %v622
  %624 = vmatmul.f32.gmra.mxu0 %v623
  %v625 = vpop.f32.mrf.mxu0
  %v626 = vadd.f32 %v572, %v625
  %627 = vdwg.mxu0
  %v628 = vand.u32 %v427, 4294901760
  %629 = vmatpush.msra.mxu0 %v628
  %v630 = vand.u32 %v426, 4294901760
  %631 = vmatpush.msra.mxu0 %v630
  %v632 = vand.u32 %v425, 4294901760
  %633 = vmatpush.msra.mxu0 %v632
  %v634 = vand.u32 %v424, 4294901760
  %635 = vmatpush.msra.mxu0 %v634
  %v636 = vand.u32 %v423, 4294901760
  %637 = vmatpush.msra.mxu0 %v636
  %v638 = vand.u32 %v422, 4294901760
  %639 = vmatpush.msra.mxu0 %v638
  %v640 = vand.u32 %v421, 4294901760
  %641 = vmatpush.msra.mxu0 %v640
  %v642 = vand.u32 %v420, 4294901760
  %643 = vmatpush.msra.mxu0 %v642
  %v644 = vand.u32 %v419, 4294901760
  %645 = vmatpush.msra.mxu0 %v644
  %v646 = vand.u32 %v418, 4294901760
  %647 = vmatpush.msra.mxu0 %v646
  %v648 = vand.u32 %v417, 4294901760
  %649 = vmatpush.msra.mxu0 %v648
  %v650 = vand.u32 %v416, 4294901760
  %651 = vmatpush.msra.mxu0 %v650
  %v652 = vand.u32 %v415, 4294901760
  %653 = vmatpush.msra.mxu0 %v652
  %v654 = vand.u32 %v414, 4294901760
  %655 = vmatpush.msra.mxu0 %v654
  %v656 = vand.u32 %v413, 4294901760
  %657 = vmatpush.msra.mxu0 %v656
  %v658 = vand.u32 %v412, 4294901760
  %659 = vmatpush.msra.mxu0 %v658
  %v660 = vand.u32 %v411, 4294901760
  %v661 = vsub.f32 %v411, %v660
  %v662 = vand.u32 %v661, 4294901760
  %663 = vmatmul.f32.gmra.mxu0 %v662
  %v664 = vpop.f32.mrf.mxu0
  %v665 = vadd.f32 %v626, %v664
  %666 = vdwg.mxu0
  %v667 = vand.u32 %v427, 4294901760
  %v668 = vsub.f32 %v427, %v667
  %v669 = vand.u32 %v668, 4294901760
  %670 = vmatpush.msra.mxu0 %v669
  %v671 = vand.u32 %v426, 4294901760
  %v672 = vsub.f32 %v426, %v671
  %v673 = vand.u32 %v672, 4294901760
  %674 = vmatpush.msra.mxu0 %v673
  %v675 = vand.u32 %v425, 4294901760
  %v676 = vsub.f32 %v425, %v675
  %v677 = vand.u32 %v676, 4294901760
  %678 = vmatpush.msra.mxu0 %v677
  %v679 = vand.u32 %v424, 4294901760
  %v680 = vsub.f32 %v424, %v679
  %v681 = vand.u32 %v680, 4294901760
  %682 = vmatpush.msra.mxu0 %v681
  %v683 = vand.u32 %v423, 4294901760
  %v684 = vsub.f32 %v423, %v683
  %v685 = vand.u32 %v684, 4294901760
  %686 = vmatpush.msra.mxu0 %v685
  %v687 = vand.u32 %v422, 4294901760
  %v688 = vsub.f32 %v422, %v687
  %v689 = vand.u32 %v688, 4294901760
  %690 = vmatpush.msra.mxu0 %v689
  %v691 = vand.u32 %v421, 4294901760
  %v692 = vsub.f32 %v421, %v691
  %v693 = vand.u32 %v692, 4294901760
  %694 = vmatpush.msra.mxu0 %v693
  %v695 = vand.u32 %v420, 4294901760
  %v696 = vsub.f32 %v420, %v695
  %v697 = vand.u32 %v696, 4294901760
  %698 = vmatpush.msra.mxu0 %v697
  %v699 = vand.u32 %v419, 4294901760
  %v700 = vsub.f32 %v419, %v699
  %v701 = vand.u32 %v700, 4294901760
  %702 = vmatpush.msra.mxu0 %v701
  %v703 = vand.u32 %v418, 4294901760
  %v704 = vsub.f32 %v418, %v703
  %v705 = vand.u32 %v704, 4294901760
  %706 = vmatpush.msra.mxu0 %v705
  %v707 = vand.u32 %v417, 4294901760
  %v708 = vsub.f32 %v417, %v707
  %v709 = vand.u32 %v708, 4294901760
  %710 = vmatpush.msra.mxu0 %v709
  %v711 = vand.u32 %v416, 4294901760
  %v712 = vsub.f32 %v416, %v711
  %v713 = vand.u32 %v712, 4294901760
  %714 = vmatpush.msra.mxu0 %v713
  %v715 = vand.u32 %v415, 4294901760
  %v716 = vsub.f32 %v415, %v715
  %v717 = vand.u32 %v716, 4294901760
  %718 = vmatpush.msra.mxu0 %v717
  %v719 = vand.u32 %v414, 4294901760
  %v720 = vsub.f32 %v414, %v719
  %v721 = vand.u32 %v720, 4294901760
  %722 = vmatpush.msra.mxu0 %v721
  %v723 = vand.u32 %v413, 4294901760
  %v724 = vsub.f32 %v413, %v723
  %v725 = vand.u32 %v724, 4294901760
  %726 = vmatpush.msra.mxu0 %v725
  %v727 = vand.u32 %v412, 4294901760
  %v728 = vsub.f32 %v412, %v727
  %v729 = vand.u32 %v728, 4294901760
  %730 = vmatpush.msra.mxu0 %v729
  %v731 = vand.u32 %v411, 4294901760
  %732 = vmatmul.f32.gmra.mxu0 %v731
  %v733 = vpop.f32.mrf.mxu0
  %v734 = vadd.f32 %v665, %v733
  %735 = vdwg.mxu0
  %v736 = vand.u32 %v427, 4294901760
  %737 = vmatpush.msra.mxu0 %v736
  %v738 = vand.u32 %v426, 4294901760
  %739 = vmatpush.msra.mxu0 %v738
  %v740 = vand.u32 %v425, 4294901760
  %741 = vmatpush.msra.mxu0 %v740
  %v742 = vand.u32 %v424, 4294901760
  %743 = vmatpush.msra.mxu0 %v742
  %v744 = vand.u32 %v423, 4294901760
  %745 = vmatpush.msra.mxu0 %v744
  %v746 = vand.u32 %v422, 4294901760
  %747 = vmatpush.msra.mxu0 %v746
  %v748 = vand.u32 %v421, 4294901760
  %749 = vmatpush.msra.mxu0 %v748
  %v750 = vand.u32 %v420, 4294901760
  %751 = vmatpush.msra.mxu0 %v750
  %v752 = vand.u32 %v419, 4294901760
  %753 = vmatpush.msra.mxu0 %v752
  %v754 = vand.u32 %v418, 4294901760
  %755 = vmatpush.msra.mxu0 %v754
  %v756 = vand.u32 %v417, 4294901760
  %757 = vmatpush.msra.mxu0 %v756
  %v758 = vand.u32 %v416, 4294901760
  %759 = vmatpush.msra.mxu0 %v758
  %v760 = vand.u32 %v415, 4294901760
  %761 = vmatpush.msra.mxu0 %v760
  %v762 = vand.u32 %v414, 4294901760
  %763 = vmatpush.msra.mxu0 %v762
  %v764 = vand.u32 %v413, 4294901760
  %765 = vmatpush.msra.mxu0 %v764
  %v766 = vand.u32 %v412, 4294901760
  %767 = vmatpush.msra.mxu0 %v766
  %v768 = vand.u32 %v411, 4294901760
  %769 = vmatmul.f32.gmra.mxu0 %v768
  %v770 = vpop.f32.mrf.mxu0
  %v771 = vadd.f32 %v734, %v770
  %772 = vdwg.mxu0
  %vm773 = vcmask 7168
  %774 = vst.msk [vmem:[%s7] sm:$0xff] %vm773, %v771
  // Predicated region
  $region30: #{tpu_custom_call.1} parent=0 // pred_check
    _
  $region31: #{tpu_custom_call.1} parent=0 // pred_check_branch
    %776 = sbr.rel (0) target = $region33
  $region32: #{tpu_custom_call.1} parent=0 // pred_region
    _
  $region33: #{tpu_custom_call.1} parent=0 // pred_fallthru
    _
  // Predicated region
  $region34: #{tpu_custom_call.1} parent=0 // pred_check
    _
  $region35: #{tpu_custom_call.1} parent=0 // pred_check_branch
    %778 = sbr.rel (0) target = $region37
  $region36: #{tpu_custom_call.1} parent=0 // pred_region
    _
  $region37: #{tpu_custom_call.1} parent=0 // pred_fallthru
    _

</llo_original>
